<compile_context>
chip_gen: v5e
topology: v5e:2x2
jax: 0.10.0
libtpu: 0.0.40
codegen_flags: <defaults>
</compile_context>

<pallas_src>
import functools

import numpy as np
import jax
import jax.numpy as jnp
from jax.experimental import pallas as pl
from jax.experimental.pallas import tpu as pltpu


# ----------------------------------------------------------------------------- helpers
def ceil_num_groups(in_features: int, group_size: int, weight_bits: int = 4) -> int:
    # TODO(synk): module contract requires in_features % group_size == 0; exact ceil
    # is sufficient here.
    return pl.cdiv(in_features, group_size)


def pack_module_qweight(q):
    """q: (OC, IC) int32 in [0, 15] -> module buffer (OC//4, IC) int16."""
    OC, IC = q.shape
    q4 = q.reshape(OC // 4, 4, IC).astype(jnp.uint32)
    packed = q4[:, 0] | (q4[:, 1] << 4) | (q4[:, 2] << 8) | (q4[:, 3] << 12)
    return jax.lax.bitcast_convert_type(packed.astype(jnp.uint16), jnp.int16)


def unpack_module_qweight(qweight_i16, out_features, in_features):
    """module buffer (OC//4, IC) int16 -> q (OC, IC) int32."""
    p = jax.lax.bitcast_convert_type(qweight_i16, jnp.uint16).astype(jnp.uint32)
    nib = jnp.stack([(p >> (4 * j)) & 0xF for j in range(4)], axis=1)  # (OC//4, 4, IC)
    return nib.reshape(out_features, in_features).astype(jnp.int32)


def repack_for_tpu(q, group_size):
    """q (OC, IC) int32 -> kernel-layout packed (IC//4, OC) int16 (see layout above)."""
    OC, IC = q.shape
    gs = group_size
    ng = IC // gs
    sub = gs // 4
    qt = q.T.astype(jnp.uint32).reshape(ng, 4, sub, OC)  # k = g*gs + j*sub + r
    packed = qt[:, 0] | (qt[:, 1] << 4) | (qt[:, 2] << 8) | (qt[:, 3] << 12)  # (ng,sub,OC)
    packed = packed.reshape(ng * sub, OC).astype(jnp.uint16)
    return jax.lax.bitcast_convert_type(packed, jnp.int16)


def prepare_w4_weights(qweight, scales, scaled_zeros, bias, *,
                       in_features, out_features, group_size):
    """One-time (weight-load-time) repack + upcast; hoisted out of the forward path."""
    assert in_features % group_size == 0
    ng = in_features // group_size
    q = unpack_module_qweight(qweight, out_features, in_features)
    qw_tpu = repack_for_tpu(q, group_size)                       # (K//4, N) int16
    s = scales.astype(jnp.float32)                               # (ng, N)
    z = scaled_zeros.astype(jnp.float32)                         # (ng, N)
    if bias is None:
        b = jnp.zeros((out_features,), jnp.float32)
    else:
        b = bias.astype(jnp.float32)

    # Pad N to a multiple of 128 so every block is lane-aligned (zero pads -> zero cols).
    N_pad = pl.cdiv(out_features, 128) * 128
    if N_pad != out_features:
        pad = N_pad - out_features
        qw_tpu = jnp.pad(qw_tpu, ((0, 0), (0, pad)))
        s = jnp.pad(s, ((0, 0), (0, pad)))
        z = jnp.pad(z, ((0, 0), (0, pad)))
        b = jnp.pad(b, (0, pad))

    # Extra singleton axis so the (1, tn) scale blocks satisfy the (8, 128) tiling rule.
    return (qw_tpu,
            s.reshape(ng, 1, N_pad),
            z.reshape(ng, 1, N_pad),
            b.reshape(1, N_pad))


# ------------------------------------------------------------------------------ kernel
def _w4_gemm_kernel(x_ref, qw_ref, s_ref, z_ref, b_ref, o_ref, acc_ref, *,
                    group_size, groups_per_step):
    k_step = pl.program_id(2)  # reduction axis over fused quantization groups

    @pl.when(k_step == 0)
    def _():
        acc_ref[...] = jnp.zeros_like(acc_ref)

    sub = group_size // 4
    acc = acc_ref[...]
    for t in range(groups_per_step):  # static unroll over fused quant groups
        # --- unpack int4 nibbles.  The leading & 0xFFFF zeroes the int16 sign
        #     extension so the subsequent shift/mask is unambiguous.
        packed = qw_ref[pl.ds(t * sub, sub), :].astype(jnp.int32) & 0xFFFF
        nibs = [jnp.bitwise_and(jnp.right_shift(packed, 4 * j), 0xF) for j in range(4)]
        # Host-side repack already ordered nibbles so a plain sublane concat rebuilds
        # the (group_size, tn) tile in k-order.
        q = jnp.concatenate(nibs, axis=0).astype(jnp.float32).astype(jnp.bfloat16)

        x_t = x_ref[:, pl.ds(t * group_size, group_size)]
        # bf16 MXU matmul of the raw nibbles (values 0..15 are exact in bf16).
        xq = jnp.dot(x_t.astype(jnp.bfloat16), q, preferred_element_type=jnp.float32)
        # Per-group dequant folded onto the (tm, tn) accumulator (all in f32):
        #     x @ (q*s + z) == (x @ q) * s + rowsum(x) * z
        rs = jnp.sum(x_t.astype(jnp.float32), axis=1, keepdims=True)  # (tm, 1)
        acc = acc + xq * s_ref[t] + rs * z_ref[t]
    acc_ref[...] = acc

    @pl.when(k_step == pl.num_programs(2) - 1)
    def _():
        o_ref[...] = (acc_ref[...] + b_ref[...]).astype(o_ref.dtype)


# ----------------------------------------------------------------------------- wrapper
@functools.partial(jax.jit, static_argnames=("group_size", "out_features"))
def w4_linear_forward(x, qw_tpu, scales_f32, zeros_f32, bias_f32, *,
                      group_size, out_features):
    """Pallas equivalent of W4Linear.forward with pre-packed weights.

    x: (..., in_features) -> (..., out_features).
    """
    *lead, K = x.shape
    assert K % group_size == 0
    ng = K // group_size
    Kq, N_pad = qw_tpu.shape
    assert Kq == K // 4
    assert scales_f32.shape == (ng, 1, N_pad) and zeros_f32.shape == (ng, 1, N_pad)

    M = int(np.prod(lead)) if lead else 1
    x2 = x.reshape(M, K)

    # ---- tile selection (modest tiles: fits every generation's scoped VMEM) ----
    tn = 256 if (N_pad % 256 == 0 and N_pad >= 256) else 128
    # Fuse quantization groups per K step (amortize ~0.35us/step, bigger weight DMAs).
    gp = 1
    for cand in (4, 2):
        if ng % cand == 0 and cand * group_size <= 512:
            gp = cand
            break
    if M >= 256:
        tm = 256
    else:
        tm = max(16, ((M + 15) // 16) * 16)  # min 16: keeps bf16 output tiles full-width
    M_pad = pl.cdiv(M, tm) * tm
    if M_pad != M:
        x2 = jnp.pad(x2, ((0, M_pad - M), (0, 0)))

    grid = (M_pad // tm, N_pad // tn, ng // gp)
    kernel = functools.partial(_w4_gemm_kernel,
                               group_size=group_size, groups_per_step=gp)

    out = pl.pallas_call(
        kernel,
        out_shape=jax.ShapeDtypeStruct((M_pad, N_pad), x.dtype),
        grid_spec=pltpu.PrefetchScalarGridSpec(
            num_scalar_prefetch=0,
            grid=grid,
            in_specs=[
                pl.BlockSpec((tm, gp * group_size), lambda i, j, k: (i, k)),       # x
                pl.BlockSpec((gp * group_size // 4, tn), lambda i, j, k: (k, j)),  # packed w
                pl.BlockSpec((gp, 1, tn), lambda i, j, k: (k, 0, j)),              # scales
                pl.BlockSpec((gp, 1, tn), lambda i, j, k: (k, 0, j)),              # scaled_zeros
                pl.BlockSpec((1, tn), lambda i, j, k: (0, j)),                     # bias
            ],
            out_specs=pl.BlockSpec((tm, tn), lambda i, j, k: (i, j)),
            scratch_shapes=[pltpu.VMEM((tm, tn), jnp.float32)],
        ),
        compiler_params=pltpu.CompilerParams(
            dimension_semantics=("parallel", "parallel", "arbitrary")
        ),
    )(x2, qw_tpu, scales_f32, zeros_f32, bias_f32)

    return out[:M, :out_features].reshape(*lead, out_features)


# -------------------------------------------------------------------------------- main
if __name__ == "__main__":
    in_features = 256
    out_features = 256
    group_size = 128

    ng = ceil_num_groups(in_features, group_size)
    key = jax.random.PRNGKey(0)
    k1, k2, k3, k4, k5, k6 = jax.random.split(key, 6)

    # Deterministic synthetic "checkpoint": 4-bit weights, group scales / scaled zeros.
    q_int = jax.random.randint(k1, (out_features, in_features), 0, 16, dtype=jnp.int32)
    scales = (jax.random.uniform(k2, (ng, out_features), jnp.float32) * 0.02 + 0.005
              ).astype(jnp.bfloat16)
    zero_pts = jax.random.randint(k3, (ng, out_features), 0, 16, dtype=jnp.int32)
    scaled_zeros = (-(zero_pts.astype(jnp.float32) * scales.astype(jnp.float32))
                    ).astype(jnp.bfloat16)
    bias = (jax.random.normal(k4, (out_features,), jnp.float32) * 0.1).astype(jnp.bfloat16)

    qweight = pack_module_qweight(q_int)  # module buffer shape (OC//4, IC) int16

    # One-time weight repack (hoisted out of the forward path).
    qw_tpu, s_f32, z_f32, b_f32 = prepare_w4_weights(
        qweight, scales, scaled_zeros, bias,
        in_features=in_features, out_features=out_features, group_size=group_size)
    qw_tpu = jax.block_until_ready(qw_tpu)

    # Pure-JAX reference of the dequant matmul.
    s_full = jnp.repeat(scales.astype(jnp.float32), group_size, axis=0)        # (IC, OC)
    z_full = jnp.repeat(scaled_zeros.astype(jnp.float32), group_size, axis=0)  # (IC, OC)
    w_dq = q_int.T.astype(jnp.float32) * s_full + z_full                       # (IC, OC)

    def ref_fwd(xa):
        lead = xa.shape[:-1]
        return (xa.reshape(-1, in_features).astype(jnp.float32) @ w_dq
                + bias.astype(jnp.float32)).reshape(*lead, out_features)

    # --- GEMM-shaped call (M >= 8, the gemm_awq path of the reference module) ---
    batch, seq = 2, 8
    x = jax.random.normal(k5, (batch, seq, in_features), jnp.float32).astype(jnp.bfloat16)
    out = w4_linear_forward(x, qw_tpu, s_f32, z_f32, b_f32,
                            group_size=group_size, out_features=out_features)
    out = jax.block_until_ready(out)
    assert out.shape == (batch, seq, out_features) and out.dtype == x.dtype
    np.testing.assert_allclose(np.asarray(out, dtype=np.float32),
                               np.asarray(ref_fwd(x)), rtol=2e-2, atol=2e-2)

    # --- decode-shaped call (M < 8, the gemv_awq path; same math, same kernel) ---
    x_small = jax.random.normal(k6, (1, 4, in_features), jnp.float32).astype(jnp.bfloat16)
    out_small = w4_linear_forward(x_small, qw_tpu, s_f32, z_f32, b_f32,
                                  group_size=group_size, out_features=out_features)
    out_small = jax.block_until_ready(out_small)
    assert out_small.shape == (1, 4, out_features) and out_small.dtype == x_small.dtype
    np.testing.assert_allclose(np.asarray(out_small, dtype=np.float32),
                               np.asarray(ref_fwd(x_small)), rtol=2e-2, atol=2e-2)

    print("KERNEL_OK")
</pallas_src>

<mosaic_0001>
module attributes {stable_mosaic.version = 11 : i64} {
  func.func @_w4_gemm_kernel(%arg0: i32, %arg1: i32, %arg2: i32, %arg3: memref<16x256xbf16, #tpu.memory_space<vmem>>, %arg4: memref<64x256xi16, #tpu.memory_space<vmem>>, %arg5: memref<2x1x256xf32, #tpu.memory_space<vmem>>, %arg6: memref<2x1x256xf32, #tpu.memory_space<vmem>>, %arg7: memref<1x256xf32, #tpu.memory_space<vmem>>, %arg8: memref<16x256xbf16, #tpu.memory_space<vmem>>, %arg9: memref<16x256xf32, #tpu.memory_space<vmem>>) attributes {dimension_semantics = [#tpu.dimension_semantics<parallel>, #tpu.dimension_semantics<parallel>, #tpu.dimension_semantics<arbitrary>], iteration_bounds = array<i64: 1, 1, 1>, scalar_prefetch = 0 : i64, scratch_operands = 1 : i64, tpu.core_type = #tpu.core_type<tc>, window_params = [{transform_indices = @transform_0, window_bounds = array<i64: 16, 256>}, {transform_indices = @transform_1, window_bounds = array<i64: 64, 256>}, {transform_indices = @transform_2, window_bounds = array<i64: 2, 1, 256>}, {transform_indices = @transform_3, window_bounds = array<i64: 2, 1, 256>}, {transform_indices = @transform_4, window_bounds = array<i64: 1, 256>}, {transform_indices = @transform_5, window_bounds = array<i64: 16, 256>}]} {
    %c0_i32 = arith.constant 0 : i32
    %0 = arith.cmpi eq, %arg2, %c0_i32 : i32
    %1 = arith.extui %0 : i1 to i32
    %c0_i32_0 = arith.constant 0 : i32
    %2 = arith.cmpi ne, %1, %c0_i32_0 : i32
    scf.if %2 {
      %cst_39 = arith.constant 0.000000e+00 : f32
      %86 = vector.broadcast %cst_39 : f32 to vector<16x256xf32>
      %c0_40 = arith.constant 0 : index
      %c0_41 = arith.constant 0 : index
      %87 = vector.load %arg9[%c0_40, %c0_41] : memref<16x256xf32, #tpu.memory_space<vmem>>, vector<16x256xf32>
      tpu.vector_store %arg9[%c0_40, %c0_41], %86 {strides = array<i32>} : memref<16x256xf32, #tpu.memory_space<vmem>>, vector<16x256xf32>,
    } else {
    }
    %c0 = arith.constant 0 : index
    %c0_1 = arith.constant 0 : index
    %3 = vector.load %arg9[%c0, %c0_1] : memref<16x256xf32, #tpu.memory_space<vmem>>, vector<16x256xf32>
    %c0_2 = arith.constant 0 : index
    %c0_3 = arith.constant 0 : index
    %4 = vector.load %arg4[%c0_2, %c0_3] : memref<64x256xi16, #tpu.memory_space<vmem>>, vector<32x256xi16>
    %5 = arith.extsi %4 : vector<32x256xi16> to vector<32x256xi32>
    %c65535_i32 = arith.constant 65535 : i32
    %6 = vector.broadcast %c65535_i32 : i32 to vector<32x256xi32>
    %7 = arith.andi %5, %6 : vector<32x256xi32>
    %c0_i32_4 = arith.constant 0 : i32
    %8 = vector.broadcast %c0_i32_4 : i32 to vector<32x256xi32>
    %9 = arith.shrsi %7, %8 : vector<32x256xi32>
    %c15_i32 = arith.constant 15 : i32
    %10 = vector.broadcast %c15_i32 : i32 to vector<32x256xi32>
    %11 = arith.andi %9, %10 : vector<32x256xi32>
    %c4_i32 = arith.constant 4 : i32
    %12 = vector.broadcast %c4_i32 : i32 to vector<32x256xi32>
    %13 = arith.shrsi %7, %12 : vector<32x256xi32>
    %c15_i32_5 = arith.constant 15 : i32
    %14 = vector.broadcast %c15_i32_5 : i32 to vector<32x256xi32>
    %15 = arith.andi %13, %14 : vector<32x256xi32>
    %c8_i32 = arith.constant 8 : i32
    %16 = vector.broadcast %c8_i32 : i32 to vector<32x256xi32>
    %17 = arith.shrsi %7, %16 : vector<32x256xi32>
    %c15_i32_6 = arith.constant 15 : i32
    %18 = vector.broadcast %c15_i32_6 : i32 to vector<32x256xi32>
    %19 = arith.andi %17, %18 : vector<32x256xi32>
    %c12_i32 = arith.constant 12 : i32
    %20 = vector.broadcast %c12_i32 : i32 to vector<32x256xi32>
    %21 = arith.shrsi %7, %20 : vector<32x256xi32>
    %c15_i32_7 = arith.constant 15 : i32
    %22 = vector.broadcast %c15_i32_7 : i32 to vector<32x256xi32>
    %23 = arith.andi %21, %22 : vector<32x256xi32>
    %24 = tpu.concatenate %11, %15, %19, %23 in 0 : vector<32x256xi32>, vector<32x256xi32>, vector<32x256xi32>, vector<32x256xi32> -> vector<128x256xi32>
    %25 = arith.sitofp %24 : vector<128x256xi32> to vector<128x256xf32>
    %26 = arith.truncf %25 : vector<128x256xf32> to vector<128x256xbf16>
    %c0_8 = arith.constant 0 : index
    %c0_9 = arith.constant 0 : index
    %27 = vector.load %arg3[%c0_8, %c0_9] : memref<16x256xbf16, #tpu.memory_space<vmem>>, vector<16x128xbf16>
    %cst = arith.constant dense<0.000000e+00> : vector<16x256xf32>
    %28 = tpu.matmul %27, %26, %cst {dimension_numbers = #tpu.dot_dimension_numbers<[1], [0], [0], [1], [0, 0, 1, 1], [], []>} : vector<16x128xbf16>, vector<128x256xbf16>, vector<16x256xf32> -> vector<16x256xf32>
    %29 = arith.extf %27 : vector<16x128xbf16> to vector<16x128xf32>
    %cst_10 = arith.constant dense<0.000000e+00> : vector<16xf32>
    %30 = vector.multi_reduction <add>, %29, %cst_10 [1] : vector<16x128xf32> to vector<16xf32>
    %31 = vector.shape_cast %30 : vector<16xf32> to vector<16x1xf32>
    %c0_11 = arith.constant 0 : index
    %c0_12 = arith.constant 0 : index
    %c0_13 = arith.constant 0 : index
    %32 = vector.load %arg5[%c0_11, %c0_12, %c0_13] : memref<2x1x256xf32, #tpu.memory_space<vmem>>, vector<1x1x256xf32>
    %33 = vector.shape_cast %32 : vector<1x1x256xf32> to vector<1x256xf32>
    %34 = vector.broadcast %33 : vector<1x256xf32> to vector<16x256xf32>
    %35 = arith.mulf %28, %34 : vector<16x256xf32>
    %36 = arith.addf %3, %35 : vector<16x256xf32>
    %c0_14 = arith.constant 0 : index
    %c0_15 = arith.constant 0 : index
    %c0_16 = arith.constant 0 : index
    %37 = vector.load %arg6[%c0_14, %c0_15, %c0_16] : memref<2x1x256xf32, #tpu.memory_space<vmem>>, vector<1x1x256xf32>
    %38 = vector.shape_cast %37 : vector<1x1x256xf32> to vector<1x256xf32>
    %39 = vector.broadcast %31 : vector<16x1xf32> to vector<16x256xf32>
    %40 = vector.broadcast %38 : vector<1x256xf32> to vector<16x256xf32>
    %41 = arith.mulf %39, %40 : vector<16x256xf32>
    %42 = arith.addf %36, %41 : vector<16x256xf32>
    %c32 = arith.constant 32 : index
    %c0_17 = arith.constant 0 : index
    %43 = vector.load %arg4[%c32, %c0_17] : memref<64x256xi16, #tpu.memory_space<vmem>>, vector<32x256xi16>
    %44 = arith.extsi %43 : vector<32x256xi16> to vector<32x256xi32>
    %c65535_i32_18 = arith.constant 65535 : i32
    %45 = vector.broadcast %c65535_i32_18 : i32 to vector<32x256xi32>
    %46 = arith.andi %44, %45 : vector<32x256xi32>
    %c0_i32_19 = arith.constant 0 : i32
    %47 = vector.broadcast %c0_i32_19 : i32 to vector<32x256xi32>
    %48 = arith.shrsi %46, %47 : vector<32x256xi32>
    %c15_i32_20 = arith.constant 15 : i32
    %49 = vector.broadcast %c15_i32_20 : i32 to vector<32x256xi32>
    %50 = arith.andi %48, %49 : vector<32x256xi32>
    %c4_i32_21 = arith.constant 4 : i32
    %51 = vector.broadcast %c4_i32_21 : i32 to vector<32x256xi32>
    %52 = arith.shrsi %46, %51 : vector<32x256xi32>
    %c15_i32_22 = arith.constant 15 : i32
    %53 = vector.broadcast %c15_i32_22 : i32 to vector<32x256xi32>
    %54 = arith.andi %52, %53 : vector<32x256xi32>
    %c8_i32_23 = arith.constant 8 : i32
    %55 = vector.broadcast %c8_i32_23 : i32 to vector<32x256xi32>
    %56 = arith.shrsi %46, %55 : vector<32x256xi32>
    %c15_i32_24 = arith.constant 15 : i32
    %57 = vector.broadcast %c15_i32_24 : i32 to vector<32x256xi32>
    %58 = arith.andi %56, %57 : vector<32x256xi32>
    %c12_i32_25 = arith.constant 12 : i32
    %59 = vector.broadcast %c12_i32_25 : i32 to vector<32x256xi32>
    %60 = arith.shrsi %46, %59 : vector<32x256xi32>
    %c15_i32_26 = arith.constant 15 : i32
    %61 = vector.broadcast %c15_i32_26 : i32 to vector<32x256xi32>
    %62 = arith.andi %60, %61 : vector<32x256xi32>
    %63 = tpu.concatenate %50, %54, %58, %62 in 0 : vector<32x256xi32>, vector<32x256xi32>, vector<32x256xi32>, vector<32x256xi32> -> vector<128x256xi32>
    %64 = arith.sitofp %63 : vector<128x256xi32> to vector<128x256xf32>
    %65 = arith.truncf %64 : vector<128x256xf32> to vector<128x256xbf16>
    %c0_27 = arith.constant 0 : index
    %c128 = arith.constant 128 : index
    %66 = vector.load %arg3[%c0_27, %c128] : memref<16x256xbf16, #tpu.memory_space<vmem>>, vector<16x128xbf16>
    %cst_28 = arith.constant dense<0.000000e+00> : vector<16x256xf32>
    %67 = tpu.matmul %66, %65, %cst_28 {dimension_numbers = #tpu.dot_dimension_numbers<[1], [0], [0], [1], [0, 0, 1, 1], [], []>} : vector<16x128xbf16>, vector<128x256xbf16>, vector<16x256xf32> -> vector<16x256xf32>
    %68 = arith.extf %66 : vector<16x128xbf16> to vector<16x128xf32>
    %cst_29 = arith.constant dense<0.000000e+00> : vector<16xf32>
    %69 = vector.multi_reduction <add>, %68, %cst_29 [1] : vector<16x128xf32> to vector<16xf32>
    %70 = vector.shape_cast %69 : vector<16xf32> to vector<16x1xf32>
    %c1 = arith.constant 1 : index
    %c0_30 = arith.constant 0 : index
    %c0_31 = arith.constant 0 : index
    %71 = vector.load %arg5[%c1, %c0_30, %c0_31] : memref<2x1x256xf32, #tpu.memory_space<vmem>>, vector<1x1x256xf32>
    %72 = vector.shape_cast %71 : vector<1x1x256xf32> to vector<1x256xf32>
    %73 = vector.broadcast %72 : vector<1x256xf32> to vector<16x256xf32>
    %74 = arith.mulf %67, %73 : vector<16x256xf32>
    %75 = arith.addf %42, %74 : vector<16x256xf32>
    %c1_32 = arith.constant 1 : index
    %c0_33 = arith.constant 0 : index
    %c0_34 = arith.constant 0 : index
    %76 = vector.load %arg6[%c1_32, %c0_33, %c0_34] : memref<2x1x256xf32, #tpu.memory_space<vmem>>, vector<1x1x256xf32>
    %77 = vector.shape_cast %76 : vector<1x1x256xf32> to vector<1x256xf32>
    %78 = vector.broadcast %70 : vector<16x1xf32> to vector<16x256xf32>
    %79 = vector.broadcast %77 : vector<1x256xf32> to vector<16x256xf32>
    %80 = arith.mulf %78, %79 : vector<16x256xf32>
    %81 = arith.addf %75, %80 : vector<16x256xf32>
    %c0_35 = arith.constant 0 : index
    %c0_36 = arith.constant 0 : index
    %82 = vector.load %arg9[%c0_35, %c0_36] : memref<16x256xf32, #tpu.memory_space<vmem>>, vector<16x256xf32>
    tpu.vector_store %arg9[%c0_35, %c0_36], %81 {strides = array<i32>} : memref<16x256xf32, #tpu.memory_space<vmem>>, vector<16x256xf32>,
    %c0_i32_37 = arith.constant 0 : i32
    %83 = arith.cmpi eq, %arg2, %c0_i32_37 : i32
    %84 = arith.extui %83 : i1 to i32
    %c0_i32_38 = arith.constant 0 : i32
    %85 = arith.cmpi ne, %84, %c0_i32_38 : i32
    scf.if %85 {
      %c0_39 = arith.constant 0 : index
      %c0_40 = arith.constant 0 : index
      %86 = vector.load %arg9[%c0_39, %c0_40] : memref<16x256xf32, #tpu.memory_space<vmem>>, vector<16x256xf32>
      %c0_41 = arith.constant 0 : index
      %c0_42 = arith.constant 0 : index
      %87 = vector.load %arg7[%c0_41, %c0_42] : memref<1x256xf32, #tpu.memory_space<vmem>>, vector<1x256xf32>
      %88 = vector.broadcast %87 : vector<1x256xf32> to vector<16x256xf32>
      %89 = arith.addf %86, %88 : vector<16x256xf32>
      %90 = arith.truncf %89 : vector<16x256xf32> to vector<16x256xbf16>
      %c0_43 = arith.constant 0 : index
      %c0_44 = arith.constant 0 : index
      %91 = vector.load %arg8[%c0_43, %c0_44] : memref<16x256xbf16, #tpu.memory_space<vmem>>, vector<16x256xbf16>
      tpu.vector_store %arg8[%c0_43, %c0_44], %90 {strides = array<i32>} : memref<16x256xbf16, #tpu.memory_space<vmem>>, vector<16x256xbf16>,
    } else {
    }
    return
  }
  func.func @transform_0(%arg0: i32, %arg1: i32, %arg2: i32) -> (i32, i32) {
    %c0_i32 = arith.constant 0 : i32
    return %arg0, %arg2 : i32, i32
  }
  func.func @transform_1(%arg0: i32, %arg1: i32, %arg2: i32) -> (i32, i32) {
    %c0_i32 = arith.constant 0 : i32
    return %arg2, %arg1 : i32, i32
  }
  func.func @transform_2(%arg0: i32, %arg1: i32, %arg2: i32) -> (i32, i32, i32) {
    %c0_i32 = arith.constant 0 : i32
    %c0_i32_0 = arith.constant 0 : i32
    return %arg2, %c0_i32, %arg1 : i32, i32, i32
  }
  func.func @transform_3(%arg0: i32, %arg1: i32, %arg2: i32) -> (i32, i32, i32) {
    %c0_i32 = arith.constant 0 : i32
    %c0_i32_0 = arith.constant 0 : i32
    return %arg2, %c0_i32, %arg1 : i32, i32, i32
  }
  func.func @transform_4(%arg0: i32, %arg1: i32, %arg2: i32) -> (i32, i32) {
    %c0_i32 = arith.constant 0 : i32
    %c0_i32_0 = arith.constant 0 : i32
    return %c0_i32, %arg1 : i32, i32
  }
  func.func @transform_5(%arg0: i32, %arg1: i32, %arg2: i32) -> (i32, i32) {
    %c0_i32 = arith.constant 0 : i32
    return %arg0, %arg1 : i32, i32
  }
}

</mosaic_0001>

<llo_original>
// kernel: w4_linear_forward.1
$region0: #{w4_linear_forward.1}
  #allocation0 [shape = 'u32[]', space=smem, size = 0x4, offset = 0x4, fixed_abs, tag = 'smem constant byte address 0x4 - core index']
  #allocation1 [shape = 'u32[72,128]{1,0:T(1,128)}', space=vmem, size = 0x9000, scoped, tag = 'internal scratch']
  #allocation2 [shape = 'f32[16,256]{1,0:T(8,128)}', space=vmem, size = 0x4000, scoped, tag = 'scratch operand']
  %s0 = inlined_call_operand.hbm [shape: bf16[16,256], index: 0, kind: input, shape index: {}]
  %s1 = inlined_call_operand.hbm [shape: s16[64,256], index: 1, kind: input, shape index: {}]
  %s2 = inlined_call_operand.hbm [shape: f32[2,1,256], index: 2, kind: input, shape index: {}]
  %s3 = inlined_call_operand.hbm [shape: f32[2,1,256], index: 3, kind: input, shape index: {}]
  %s4 = inlined_call_operand.vmem [shape: f32[1,256], index: 4, kind: input, shape index: {}]
  %s5 = inlined_call_operand.hbm [shape: bf16[16,256], index: 5, kind: output, shape index: {}]
  %s6 = sld [smem:[#allocation0]]
  $region54: #{w4_linear_forward.1} parent=0
    _
  %s8 = ssub.s32 1, %s6
  %s9 = scalar_select 0, %s8, %s6
  $region1: #{w4_linear_forward.1} parent=0
    #allocation3 [shape = 'u8[8192]{0}', space=vmem, size = 0x2000, scoped, tag = 'input window, operand 0, single buffered']
    #allocation4 [shape = 's32[1]{0}', space=sflag, size = 0x4, scoped, tag = 'scoped memory for w4_linear_forward.1']
    #allocation5 [shape = 's32[1]{0}', space=sflag, size = 0x4, scoped, tag = 'scoped memory for w4_linear_forward.1']
    #allocation6 [shape = 'u8[32768]{0}', space=vmem, size = 0x8000, scoped, tag = 'input window, operand 1, single buffered']
    #allocation7 [shape = 's32[1]{0}', space=sflag, size = 0x4, scoped, tag = 'scoped memory for w4_linear_forward.1']
    #allocation8 [shape = 'u8[2048]{0}', space=vmem, size = 0x800, scoped, tag = 'input window, operand 2, single buffered']
    #allocation9 [shape = 'u8[2048]{0}', space=vmem, size = 0x800, scoped, tag = 'input window, operand 3, single buffered']
    #allocation10 [shape = 's32[1]{0}', space=sflag, size = 0x4, scoped, tag = 'scoped memory for w4_linear_forward.1']
    #allocation11 [shape = 'u8[8192]{0}', space=vmem, size = 0x2000, scoped, tag = 'output window, operand 0, single buffered']
    %10 = vsyncpa [#allocation4], 0
    %11 = vsyncpa [#allocation7], 0
    %12 = vsyncpa [#allocation10], 0
    %13 = vsyncpa [#allocation5], 0
    // Predicated region
    $region2: #{w4_linear_forward.1} parent=1 // pred_check
      _
    $region3: #{w4_linear_forward.1} parent=1 // pred_check_branch
      %15 = sbr.rel (0) target = $region5
    $region4: #{w4_linear_forward.1} parent=1 // pred_region
      %17 = vsyncadd [#allocation4], 0
      %s18 = sshll.u32 %s0, 4
      %s19 = int_to_ptr.hbm [resolvable:$true] %s18
      %s20 = sshll.u32 [#allocation3], 4
      %s21 = int_to_ptr.vmem [resolvable:$true] %s20
      %26 = dma.hbm_to_vmem [thread:$0]  %s19, 256, %s21, [#allocation4], 128, 128, 8
    $region5: #{w4_linear_forward.1} parent=1 // pred_fallthru
      _
    // Predicated region
    $region6: #{w4_linear_forward.1} parent=1 // pred_check
      _
    $region7: #{w4_linear_forward.1} parent=1 // pred_check_branch
      %28 = sbr.rel (0) target = $region9
    $region8: #{w4_linear_forward.1} parent=1 // pred_region
      %30 = vsyncadd [#allocation7], 0
      %s31 = sshll.u32 %s1, 4
      %s32 = int_to_ptr.hbm [resolvable:$true] %s31
      %s33 = sshll.u32 [#allocation6], 4
      %s34 = int_to_ptr.vmem [resolvable:$true] %s33
      %39 = dma.hbm_to_vmem [thread:$0]  %s32, 1024, %s34, [#allocation7], 128, 128, 8
    $region9: #{w4_linear_forward.1} parent=1 // pred_fallthru
      _
    // Predicated region
    $region10: #{w4_linear_forward.1} parent=1 // pred_check
      _
    $region11: #{w4_linear_forward.1} parent=1 // pred_check_branch
      %41 = sbr.rel (0) target = $region13
    $region12: #{w4_linear_forward.1} parent=1 // pred_region
      %43 = vsyncadd [#allocation7], 0
      %s44 = sshll.u32 %s2, 4
      %s45 = int_to_ptr.hbm [resolvable:$true] %s44
      %s46 = sshll.u32 [#allocation8], 4
      %s47 = int_to_ptr.vmem [resolvable:$true] %s46
      %52 = dma.hbm_to_vmem [thread:$0]  %s45, 64, %s47, [#allocation7], 32, 32, 2
    $region13: #{w4_linear_forward.1} parent=1 // pred_fallthru
      _
    // Predicated region
    $region14: #{w4_linear_forward.1} parent=1 // pred_check
      _
    $region15: #{w4_linear_forward.1} parent=1 // pred_check_branch
      %54 = sbr.rel (0) target = $region17
    $region16: #{w4_linear_forward.1} parent=1 // pred_region
      %56 = vsyncadd [#allocation10], 0
      %s57 = sshll.u32 %s3, 4
      %s58 = int_to_ptr.hbm [resolvable:$true] %s57
      %s59 = sshll.u32 [#allocation9], 4
      %s60 = int_to_ptr.vmem [resolvable:$true] %s59
      %65 = dma.hbm_to_vmem [thread:$0]  %s58, 64, %s60, [#allocation10], 32, 32, 2
    $region17: #{w4_linear_forward.1} parent=1 // pred_fallthru
      _
    // Predicated region
    $region18: #{w4_linear_forward.1} parent=1 // pred_check
      _
    $region19: #{w4_linear_forward.1} parent=1 // pred_check_branch
      %67 = sbr.rel (0) target = $region21
    $region20: #{w4_linear_forward.1} parent=1 // pred_region
      _
    $region21: #{w4_linear_forward.1} parent=1 // pred_fallthru
      _
    // Predicated region
    $region22: #{w4_linear_forward.1} parent=1 // pred_check
      _
    $region23: #{w4_linear_forward.1} parent=1 // pred_check_branch
      %69 = sbr.rel (0) target = $region25
    $region24: #{w4_linear_forward.1} parent=1 // pred_region
      %71 = dma.done [#allocation4], 256
    $region25: #{w4_linear_forward.1} parent=1 // pred_fallthru
      _
    // Predicated region
    $region26: #{w4_linear_forward.1} parent=1 // pred_check
      _
    $region27: #{w4_linear_forward.1} parent=1 // pred_check_branch
      %73 = sbr.rel (0) target = $region29
    $region28: #{w4_linear_forward.1} parent=1 // pred_region
      %75 = dma.done [#allocation7], 1024
    $region29: #{w4_linear_forward.1} parent=1 // pred_fallthru
      _
    // Predicated region
    $region30: #{w4_linear_forward.1} parent=1 // pred_check
      _
    $region31: #{w4_linear_forward.1} parent=1 // pred_check_branch
      %77 = sbr.rel (0) target = $region33
    $region32: #{w4_linear_forward.1} parent=1 // pred_region
      %79 = dma.done [#allocation7], 64
    $region33: #{w4_linear_forward.1} parent=1 // pred_fallthru
      _
    // Predicated region
    $region34: #{w4_linear_forward.1} parent=1 // pred_check
      _
    $region35: #{w4_linear_forward.1} parent=1 // pred_check_branch
      %81 = sbr.rel (0) target = $region37
    $region36: #{w4_linear_forward.1} parent=1 // pred_region
      %83 = dma.done [#allocation10], 64
    $region37: #{w4_linear_forward.1} parent=1 // pred_fallthru
      _
    %p84 = scmp.eq.s32.totalorder 0, 0
    // Predicated region
    $region38: #{w4_linear_forward.1} parent=1 // pred_check
      %p85 = pneg %p84
    $region39: #{w4_linear_forward.1} parent=1 // pred_check_branch
      %87 = sbr.rel (%p85) target = $region41
    $region40: #{w4_linear_forward.1} parent=1 // pred_region
      %88 = vst [vmem:[#allocation2] sm:$0xff] 0.0
      %89 = vst [vmem:[#allocation2 + $0x8] sm:$0xff] 0.0
      %90 = vst [vmem:[#allocation2 + $0x10] sm:$0xff] 0.0
      %91 = vst [vmem:[#allocation2 + $0x18] sm:$0xff] 0.0
    $region41: #{w4_linear_forward.1} parent=1 // pred_fallthru
      _
    %v92 = vld [vmem:[#allocation2] sm:$0xff]
    %v93 = vld [vmem:[#allocation2 + $0x8] sm:$0xff]
    %v94 = vld [vmem:[#allocation2 + $0x10] sm:$0xff]
    %v95 = vld [vmem:[#allocation2 + $0x18] sm:$0xff]
    %v96 = vld [vmem:[#allocation6] sm:$0xff]
    %v97 = vld [vmem:[#allocation6 + $0x8] sm:$0xff]
    %v98 = vld [vmem:[#allocation6 + $0x10] sm:$0xff]
    %v99 = vld [vmem:[#allocation6 + $0x18] sm:$0xff]
    %v100 = vunpack.c.l.b16 %v96
    %v101 = vunpack.c.h.b16 %v96
    %v102 = vunpack.c.l.b16 %v97
    %v103 = vunpack.c.h.b16 %v97
    %v104 = vunpack.c.l.b16 %v98
    %v105 = vunpack.c.h.b16 %v98
    %v106 = vunpack.c.l.b16 %v99
    %v107 = vunpack.c.h.b16 %v99
    %v108 = vand.u32 %v100, 65535
    %v109 = vand.u32 %v101, 65535
    %v110 = vand.u32 %v102, 65535
    %v111 = vand.u32 %v103, 65535
    %v112 = vand.u32 %v104, 65535
    %v113 = vand.u32 %v105, 65535
    %v114 = vand.u32 %v106, 65535
    %v115 = vand.u32 %v107, 65535
    %v116 = vand.u32 %v108, 15
    %v117 = vand.u32 %v109, 15
    %v118 = vand.u32 %v110, 15
    %v119 = vand.u32 %v111, 15
    %v120 = vand.u32 %v112, 15
    %v121 = vand.u32 %v113, 15
    %v122 = vand.u32 %v114, 15
    %v123 = vand.u32 %v115, 15
    %v124 = vshra.s32 %v108, 4
    %v125 = vshra.s32 %v109, 4
    %v126 = vshra.s32 %v110, 4
    %v127 = vshra.s32 %v111, 4
    %v128 = vshra.s32 %v112, 4
    %v129 = vshra.s32 %v113, 4
    %v130 = vshra.s32 %v114, 4
    %v131 = vshra.s32 %v115, 4
    %v132 = vand.u32 %v124, 15
    %v133 = vand.u32 %v125, 15
    %v134 = vand.u32 %v126, 15
    %v135 = vand.u32 %v127, 15
    %v136 = vand.u32 %v128, 15
    %v137 = vand.u32 %v129, 15
    %v138 = vand.u32 %v130, 15
    %v139 = vand.u32 %v131, 15
    %v140 = vshra.s32 %v108, 8
    %v141 = vshra.s32 %v109, 8
    %v142 = vshra.s32 %v110, 8
    %v143 = vshra.s32 %v111, 8
    %v144 = vshra.s32 %v112, 8
    %v145 = vshra.s32 %v113, 8
    %v146 = vshra.s32 %v114, 8
    %v147 = vshra.s32 %v115, 8
    %v148 = vand.u32 %v140, 15
    %v149 = vand.u32 %v141, 15
    %v150 = vand.u32 %v142, 15
    %v151 = vand.u32 %v143, 15
    %v152 = vand.u32 %v144, 15
    %v153 = vand.u32 %v145, 15
    %v154 = vand.u32 %v146, 15
    %v155 = vand.u32 %v147, 15
    %v156 = vshra.s32 %v108, 12
    %v157 = vshra.s32 %v109, 12
    %v158 = vshra.s32 %v110, 12
    %v159 = vshra.s32 %v111, 12
    %v160 = vshra.s32 %v112, 12
    %v161 = vshra.s32 %v113, 12
    %v162 = vshra.s32 %v114, 12
    %v163 = vshra.s32 %v115, 12
    %v164 = vand.u32 %v156, 15
    %v165 = vand.u32 %v157, 15
    %v166 = vand.u32 %v158, 15
    %v167 = vand.u32 %v159, 15
    %v168 = vand.u32 %v160, 15
    %v169 = vand.u32 %v161, 15
    %v170 = vand.u32 %v162, 15
    %v171 = vand.u32 %v163, 15
    %v172 = vcvt.s32.f32 %v116
    %v173 = vcvt.s32.f32 %v117
    %v174 = vcvt.s32.f32 %v118
    %v175 = vcvt.s32.f32 %v119
    %v176 = vcvt.s32.f32 %v120
    %v177 = vcvt.s32.f32 %v121
    %v178 = vcvt.s32.f32 %v122
    %v179 = vcvt.s32.f32 %v123
    %v180 = vcvt.s32.f32 %v132
    %v181 = vcvt.s32.f32 %v133
    %v182 = vcvt.s32.f32 %v134
    %v183 = vcvt.s32.f32 %v135
    %v184 = vcvt.s32.f32 %v136
    %v185 = vcvt.s32.f32 %v137
    %v186 = vcvt.s32.f32 %v138
    %v187 = vcvt.s32.f32 %v139
    %v188 = vcvt.s32.f32 %v148
    %v189 = vcvt.s32.f32 %v149
    %v190 = vcvt.s32.f32 %v150
    %v191 = vcvt.s32.f32 %v151
    %v192 = vcvt.s32.f32 %v152
    %v193 = vcvt.s32.f32 %v153
    %v194 = vcvt.s32.f32 %v154
    %v195 = vcvt.s32.f32 %v155
    %v196 = vcvt.s32.f32 %v164
    %v197 = vcvt.s32.f32 %v165
    %v198 = vcvt.s32.f32 %v166
    %v199 = vcvt.s32.f32 %v167
    %v200 = vcvt.s32.f32 %v168
    %v201 = vcvt.s32.f32 %v169
    %v202 = vcvt.s32.f32 %v170
    %v203 = vcvt.s32.f32 %v171
    %v204 = vpack.c.bf16 %v174, %v172
    %v205 = vpack.c.bf16 %v175, %v173
    %v206 = vpack.c.bf16 %v178, %v176
    %v207 = vpack.c.bf16 %v179, %v177
    %v208 = vpack.c.bf16 %v182, %v180
    %v209 = vpack.c.bf16 %v183, %v181
    %v210 = vpack.c.bf16 %v186, %v184
    %v211 = vpack.c.bf16 %v187, %v185
    %v212 = vpack.c.bf16 %v190, %v188
    %v213 = vpack.c.bf16 %v191, %v189
    %v214 = vpack.c.bf16 %v194, %v192
    %v215 = vpack.c.bf16 %v195, %v193
    %v216 = vpack.c.bf16 %v198, %v196
    %v217 = vpack.c.bf16 %v199, %v197
    %v218 = vpack.c.bf16 %v202, %v200
    %v219 = vpack.c.bf16 %v203, %v201
    %v220 = vld [vmem:[#allocation3] sm:$0xf]
    %v221 = vld [vmem:[#allocation3 + $0x8] sm:$0xf]
    %v224 = vunpack.c.l.b16 %v220
    %v225 = vunpack.c.l.b16 %v221
    %v226 = vpack.c.b16 %v225, %v224
    %228 = vmatpush.bf16.msra.mxu0 %v218
    %229 = vmatpush.bf16.msra.mxu0 %v216
    %230 = vmatpush.bf16.msra.mxu0 %v214
    %231 = vmatpush.bf16.msra.mxu0 %v212
    %232 = vmatpush.bf16.msra.mxu0 %v210
    %233 = vmatpush.bf16.msra.mxu0 %v208
    %234 = vmatpush.bf16.msra.mxu0 %v206
    %235 = vmatpush.bf16.msra.mxu0 %v204
    %236 = vmatmul.bf16.gmra.mxu0 %v226
    %v237 = vpop.f32.mrf.mxu0
    %v238 = vadd.f32 0.0, %v237
    %v239 = vpop.f32.mrf.mxu0
    %v240 = vadd.f32 0.0, %v239
    %241 = vdwg.mxu0
    %242 = vmatpush.bf16.msra.mxu0 %v219
    %243 = vmatpush.bf16.msra.mxu0 %v217
    %244 = vmatpush.bf16.msra.mxu0 %v215
    %245 = vmatpush.bf16.msra.mxu0 %v213
    %246 = vmatpush.bf16.msra.mxu0 %v211
    %247 = vmatpush.bf16.msra.mxu0 %v209
    %248 = vmatpush.bf16.msra.mxu0 %v207
    %249 = vmatpush.bf16.msra.mxu0 %v205
    %250 = vmatmul.bf16.gmra.mxu0 %v226
    %v251 = vpop.f32.mrf.mxu0
    %v252 = vadd.f32 0.0, %v251
    %v253 = vpop.f32.mrf.mxu0
    %v254 = vadd.f32 0.0, %v253
    %255 = vdwg.mxu0
    %v256 = vunpack.c.l.bf16 %v220
    %v257 = vunpack.c.l.bf16 %v221
    %258 = vadd.xlane.f32.xlu0 %v256
    %v259 = vpop.xlane.xlu0 %258
    %260 = vadd.xlane.f32.xlu0 %v257
    %v261 = vpop.xlane.xlu0 %260
    %v262 = vld [vmem:[#allocation8] sm:$0x3]
    %v264 = vperm.slane %v262, 0
    %v265 = vperm.slane %v262, 1
    %v268 = vmul.f32 %v238, %v264
    %v269 = vmul.f32 %v252, %v265
    %v270 = vmul.f32 %v240, %v264
    %v271 = vmul.f32 %v254, %v265
    %v272 = vadd.f32 %v92, %v268
    %v273 = vadd.f32 %v93, %v269
    %v274 = vadd.f32 %v94, %v270
    %v275 = vadd.f32 %v95, %v271
    %v276 = vld [vmem:[#allocation9] sm:$0x3]
    %v278 = vperm.slane %v276, 0
    %v279 = vperm.slane %v276, 1
    %v282 = vmul.f32 %v259, %v278
    %v283 = vmul.f32 %v259, %v279
    %v284 = vmul.f32 %v261, %v278
    %v285 = vmul.f32 %v261, %v279
    %v286 = vadd.f32 %v272, %v282
    %v287 = vadd.f32 %v273, %v283
    %v288 = vadd.f32 %v274, %v284
    %v289 = vadd.f32 %v275, %v285
    %v290 = vld [vmem:[#allocation6 + $0x20] sm:$0xff]
    %v291 = vld [vmem:[#allocation6 + $0x28] sm:$0xff]
    %v292 = vld [vmem:[#allocation6 + $0x30] sm:$0xff]
    %v293 = vld [vmem:[#allocation6 + $0x38] sm:$0xff]
    %v294 = vunpack.c.l.b16 %v290
    %v295 = vunpack.c.h.b16 %v290
    %v296 = vunpack.c.l.b16 %v291
    %v297 = vunpack.c.h.b16 %v291
    %v298 = vunpack.c.l.b16 %v292
    %v299 = vunpack.c.h.b16 %v292
    %v300 = vunpack.c.l.b16 %v293
    %v301 = vunpack.c.h.b16 %v293
    %v302 = vand.u32 %v294, 65535
    %v303 = vand.u32 %v295, 65535
    %v304 = vand.u32 %v296, 65535
    %v305 = vand.u32 %v297, 65535
    %v306 = vand.u32 %v298, 65535
    %v307 = vand.u32 %v299, 65535
    %v308 = vand.u32 %v300, 65535
    %v309 = vand.u32 %v301, 65535
    %v310 = vand.u32 %v302, 15
    %v311 = vand.u32 %v303, 15
    %v312 = vand.u32 %v304, 15
    %v313 = vand.u32 %v305, 15
    %v314 = vand.u32 %v306, 15
    %v315 = vand.u32 %v307, 15
    %v316 = vand.u32 %v308, 15
    %v317 = vand.u32 %v309, 15
    %v318 = vshra.s32 %v302, 4
    %v319 = vshra.s32 %v303, 4
    %v320 = vshra.s32 %v304, 4
    %v321 = vshra.s32 %v305, 4
    %v322 = vshra.s32 %v306, 4
    %v323 = vshra.s32 %v307, 4
    %v324 = vshra.s32 %v308, 4
    %v325 = vshra.s32 %v309, 4
    %v326 = vand.u32 %v318, 15
    %v327 = vand.u32 %v319, 15
    %v328 = vand.u32 %v320, 15
    %v329 = vand.u32 %v321, 15
    %v330 = vand.u32 %v322, 15
    %v331 = vand.u32 %v323, 15
    %v332 = vand.u32 %v324, 15
    %v333 = vand.u32 %v325, 15
    %v334 = vshra.s32 %v302, 8
    %v335 = vshra.s32 %v303, 8
    %v336 = vshra.s32 %v304, 8
    %v337 = vshra.s32 %v305, 8
    %v338 = vshra.s32 %v306, 8
    %v339 = vshra.s32 %v307, 8
    %v340 = vshra.s32 %v308, 8
    %v341 = vshra.s32 %v309, 8
    %v342 = vand.u32 %v334, 15
    %v343 = vand.u32 %v335, 15
    %v344 = vand.u32 %v336, 15
    %v345 = vand.u32 %v337, 15
    %v346 = vand.u32 %v338, 15
    %v347 = vand.u32 %v339, 15
    %v348 = vand.u32 %v340, 15
    %v349 = vand.u32 %v341, 15
    %v350 = vshra.s32 %v302, 12
    %v351 = vshra.s32 %v303, 12
    %v352 = vshra.s32 %v304, 12
    %v353 = vshra.s32 %v305, 12
    %v354 = vshra.s32 %v306, 12
    %v355 = vshra.s32 %v307, 12
    %v356 = vshra.s32 %v308, 12
    %v357 = vshra.s32 %v309, 12
    %v358 = vand.u32 %v350, 15
    %v359 = vand.u32 %v351, 15
    %v360 = vand.u32 %v352, 15
    %v361 = vand.u32 %v353, 15
    %v362 = vand.u32 %v354, 15
    %v363 = vand.u32 %v355, 15
    %v364 = vand.u32 %v356, 15
    %v365 = vand.u32 %v357, 15
    %v366 = vcvt.s32.f32 %v310
    %v367 = vcvt.s32.f32 %v311
    %v368 = vcvt.s32.f32 %v312
    %v369 = vcvt.s32.f32 %v313
    %v370 = vcvt.s32.f32 %v314
    %v371 = vcvt.s32.f32 %v315
    %v372 = vcvt.s32.f32 %v316
    %v373 = vcvt.s32.f32 %v317
    %v374 = vcvt.s32.f32 %v326
    %v375 = vcvt.s32.f32 %v327
    %v376 = vcvt.s32.f32 %v328
    %v377 = vcvt.s32.f32 %v329
    %v378 = vcvt.s32.f32 %v330
    %v379 = vcvt.s32.f32 %v331
    %v380 = vcvt.s32.f32 %v332
    %v381 = vcvt.s32.f32 %v333
    %v382 = vcvt.s32.f32 %v342
    %v383 = vcvt.s32.f32 %v343
    %v384 = vcvt.s32.f32 %v344
    %v385 = vcvt.s32.f32 %v345
    %v386 = vcvt.s32.f32 %v346
    %v387 = vcvt.s32.f32 %v347
    %v388 = vcvt.s32.f32 %v348
    %v389 = vcvt.s32.f32 %v349
    %v390 = vcvt.s32.f32 %v358
    %v391 = vcvt.s32.f32 %v359
    %v392 = vcvt.s32.f32 %v360
    %v393 = vcvt.s32.f32 %v361
    %v394 = vcvt.s32.f32 %v362
    %v395 = vcvt.s32.f32 %v363
    %v396 = vcvt.s32.f32 %v364
    %v397 = vcvt.s32.f32 %v365
    %v398 = vpack.c.bf16 %v368, %v366
    %v399 = vpack.c.bf16 %v369, %v367
    %v400 = vpack.c.bf16 %v372, %v370
    %v401 = vpack.c.bf16 %v373, %v371
    %v402 = vpack.c.bf16 %v376, %v374
    %v403 = vpack.c.bf16 %v377, %v375
    %v404 = vpack.c.bf16 %v380, %v378
    %v405 = vpack.c.bf16 %v381, %v379
    %v406 = vpack.c.bf16 %v384, %v382
    %v407 = vpack.c.bf16 %v385, %v383
    %v408 = vpack.c.bf16 %v388, %v386
    %v409 = vpack.c.bf16 %v389, %v387
    %v410 = vpack.c.bf16 %v392, %v390
    %v411 = vpack.c.bf16 %v393, %v391
    %v412 = vpack.c.bf16 %v396, %v394
    %v413 = vpack.c.bf16 %v397, %v395
    %v414 = vld [vmem:[#allocation3 + $0x4] sm:$0xf]
    %v415 = vld [vmem:[#allocation3 + $0xc] sm:$0xf]
    %v418 = vunpack.c.l.b16 %v414
    %v419 = vunpack.c.l.b16 %v415
    %v420 = vpack.c.b16 %v419, %v418
    %422 = vmatpush.bf16.msra.mxu0 %v412
    %423 = vmatpush.bf16.msra.mxu0 %v410
    %424 = vmatpush.bf16.msra.mxu0 %v408
    %425 = vmatpush.bf16.msra.mxu0 %v406
    %426 = vmatpush.bf16.msra.mxu0 %v404
    %427 = vmatpush.bf16.msra.mxu0 %v402
    %428 = vmatpush.bf16.msra.mxu0 %v400
    %429 = vmatpush.bf16.msra.mxu0 %v398
    %430 = vmatmul.bf16.gmra.mxu0 %v420
    %v431 = vpop.f32.mrf.mxu0
    %v432 = vadd.f32 0.0, %v431
    %v433 = vpop.f32.mrf.mxu0
    %v434 = vadd.f32 0.0, %v433
    %435 = vdwg.mxu0
    %436 = vmatpush.bf16.msra.mxu0 %v413
    %437 = vmatpush.bf16.msra.mxu0 %v411
    %438 = vmatpush.bf16.msra.mxu0 %v409
    %439 = vmatpush.bf16.msra.mxu0 %v407
    %440 = vmatpush.bf16.msra.mxu0 %v405
    %441 = vmatpush.bf16.msra.mxu0 %v403
    %442 = vmatpush.bf16.msra.mxu0 %v401
    %443 = vmatpush.bf16.msra.mxu0 %v399
    %444 = vmatmul.bf16.gmra.mxu0 %v420
    %v445 = vpop.f32.mrf.mxu0
    %v446 = vadd.f32 0.0, %v445
    %v447 = vpop.f32.mrf.mxu0
    %v448 = vadd.f32 0.0, %v447
    %449 = vdwg.mxu0
    %v450 = vunpack.c.l.bf16 %v414
    %v451 = vunpack.c.l.bf16 %v415
    %452 = vadd.xlane.f32.xlu0 %v450
    %v453 = vpop.xlane.xlu0 %452
    %454 = vadd.xlane.f32.xlu0 %v451
    %v455 = vpop.xlane.xlu0 %454
    %s456 = scalar_lea.vmem [#allocation8], 2
    %v457 = vld [vmem:[%s456] sm:$0x3]
    %v459 = vperm.slane %v457, 0
    %v460 = vperm.slane %v457, 1
    %v463 = vmul.f32 %v432, %v459
    %v464 = vmul.f32 %v446, %v460
    %v465 = vmul.f32 %v434, %v459
    %v466 = vmul.f32 %v448, %v460
    %v467 = vadd.f32 %v286, %v463
    %v468 = vadd.f32 %v287, %v464
    %v469 = vadd.f32 %v288, %v465
    %v470 = vadd.f32 %v289, %v466
    %s471 = scalar_lea.vmem [#allocation9], 2
    %v472 = vld [vmem:[%s471] sm:$0x3]
    %v474 = vperm.slane %v472, 0
    %v475 = vperm.slane %v472, 1
    %v478 = vmul.f32 %v453, %v474
    %v479 = vmul.f32 %v453, %v475
    %v480 = vmul.f32 %v455, %v474
    %v481 = vmul.f32 %v455, %v475
    %v482 = vadd.f32 %v467, %v478
    %v483 = vadd.f32 %v468, %v479
    %v484 = vadd.f32 %v469, %v480
    %v485 = vadd.f32 %v470, %v481
    %486 = vst [vmem:[#allocation2] sm:$0xff] %v482
    %487 = vst [vmem:[#allocation2 + $0x8] sm:$0xff] %v483
    %488 = vst [vmem:[#allocation2 + $0x10] sm:$0xff] %v484
    %489 = vst [vmem:[#allocation2 + $0x18] sm:$0xff] %v485
    // Predicated region
    $region42: #{w4_linear_forward.1} parent=1 // pred_check
      %p490 = pneg %p84
    $region43: #{w4_linear_forward.1} parent=1 // pred_check_branch
      %492 = sbr.rel (%p490) target = $region45
    $region44: #{w4_linear_forward.1} parent=1 // pred_region
      %v493 = vld [vmem:[#allocation2] sm:$0xff]
      %v494 = vld [vmem:[#allocation2 + $0x8] sm:$0xff]
      %v495 = vld [vmem:[#allocation2 + $0x10] sm:$0xff]
      %v496 = vld [vmem:[#allocation2 + $0x18] sm:$0xff]
      %v497 = vld [vmem:[%s4] sm:$0x3]
      %v499 = vperm.slane %v497, 0
      %v500 = vperm.slane %v497, 1
      %v503 = vadd.f32 %v493, %v499
      %v504 = vadd.f32 %v494, %v500
      %v505 = vadd.f32 %v495, %v499
      %v506 = vadd.f32 %v496, %v500
      %v507 = vpack.c.bf16 %v504, %v503
      %v508 = vpack.c.bf16 %v506, %v505
      %509 = vst [vmem:[#allocation11] sm:$0xff] %v507
      %510 = vst [vmem:[#allocation11 + $0x8] sm:$0xff] %v508
    $region45: #{w4_linear_forward.1} parent=1 // pred_fallthru
      _
    // Predicated region
    $region46: #{w4_linear_forward.1} parent=1 // pred_check
      _
    $region47: #{w4_linear_forward.1} parent=1 // pred_check_branch
      %512 = sbr.rel (0) target = $region49
    $region48: #{w4_linear_forward.1} parent=1 // pred_region
      %514 = vsyncadd [#allocation5], 0
      %s515 = sshll.u32 [#allocation11], 4
      %s516 = int_to_ptr.vmem [resolvable:$true] %s515
      %s517 = sshll.u32 %s5, 4
      %s518 = int_to_ptr.hbm [resolvable:$true] %s517
      %523 = dma.vmem_to_hbm [thread:$0]  %s516, 256, %s518, [#allocation5], 128, 128, 8
    $region49: #{w4_linear_forward.1} parent=1 // pred_fallthru
      _
    // Predicated region
    $region50: #{w4_linear_forward.1} parent=1 // pred_check
      _
    $region51: #{w4_linear_forward.1} parent=1 // pred_check_branch
      %525 = sbr.rel (0) target = $region53
    $region52: #{w4_linear_forward.1} parent=1 // pred_region
      %527 = dma.done [#allocation5], 256
    $region53: #{w4_linear_forward.1} parent=1 // pred_fallthru
      _
    %528 = vsyncpa [#allocation4], 1
    %529 = vsyncpa [#allocation7], 1
    %530 = vsyncpa [#allocation10], 1
    %531 = vsyncpa [#allocation5], 1

</llo_original>
